<compile_context>
chip_gen: v6e
topology: v6e:2x2x1
jax: 0.10.0
libtpu: 0.0.40
codegen_flags: <defaults>
</compile_context>

<pallas_src>
import math
from functools import partial

import jax
import jax.numpy as jnp
from jax.experimental import pallas as pl
from jax.experimental.pallas import tpu as pltpu


# -----------------------------------------------------------------------------
# Small host-side helpers.
# -----------------------------------------------------------------------------
def _round_up(x, m):
    return (x + m - 1) // m * m


def _vmem_capacity_bytes():
    """Physical VMEM of the local TPU (128 MiB v5e/v6e, 64 MiB v7x); safe fallback."""
    try:
        info = pltpu.get_tpu_info()
        cap = getattr(info, "vmem_capacity_bytes", None)
        if cap:
            return int(cap)
    except Exception:
        pass
    return 128 * 2 ** 20


def _vmem_limit(estimate_bytes, capacity_bytes):
    """Scoped-VMEM request: 1.5x the padded block footprint, >= 32 MiB, capped with
    headroom below physical VMEM (compiler internal scratch / semaphores / spill)."""
    ceiling = int(0.82 * capacity_bytes)
    return int(min(max(1.5 * estimate_bytes, 32 * 2 ** 20), ceiling))


def _padded_bytes(shape, itemsize):
    """Conservative VMEM footprint of one buffer: lane dim padded to 128, sublane
    dim padded to 16 (covers bf16 packing)."""
    dims = list(shape)
    dims[-1] = _round_up(max(dims[-1], 1), 128)
    if len(dims) >= 2:
        dims[-2] = _round_up(max(dims[-2], 1), 16)
    n = 1
    for d in dims:
        n *= d
    return n * itemsize


def _pick_tile(n, cap, align):
    """Largest tile <= cap that is a multiple of `align` and divides n.
    Falls back to the full axis (always correct; the scoped-VMEM request is still
    sized from the actual tile, so an awkward `n` degrades loudly, not silently)."""
    if n <= cap:
        return n
    t = (cap // align) * align
    while t >= align:
        if n % t == 0:
            return t
        t -= align
    return n


# -----------------------------------------------------------------------------
# Kernel 1: fused Q/K/V projection, head-major output (no XLA transpose pass).
# -----------------------------------------------------------------------------
def _qkv_proj_kernel(xq_ref, xk_ref, xv_ref, w_ref, b_ref, o_ref, *, hc, dk,
                     compute_dtype):
    # x blocks: (1, ts, dmodel); w: (3, dmodel, hc*dk); b: (3, 1, hc*dk);
    # o: (3, 1, hc, ts, dk) -- head-major, written via per-head lane-slice stores
    # so the (seq, heads, dk) relayout happens once, in VMEM, amortized here
    # instead of as an extra HBM read+write pass between the kernels.
    for i, x_ref in enumerate((xq_ref, xk_ref, xv_ref)):
        x = x_ref[0].astype(compute_dtype)                        # (ts, dmodel)
        y = jnp.dot(x, w_ref[i], preferred_element_type=jnp.float32) + b_ref[i]
        y = y.astype(o_ref.dtype)                                 # (ts, hc*dk)
        for h in range(hc):                                       # unrolled head scatter
            o_ref[i, 0, h] = y[:, h * dk:(h + 1) * dk]


# -----------------------------------------------------------------------------
# Kernel 2: flash attention (all heads batched) + Wo projection + branch bias.
# -----------------------------------------------------------------------------
def _flash_attn_kernel(q_ref, k_ref, v_ref, wo_ref, kbo_ref, out_ref,
                       m_ref, l_ref, acc_ref, *, compute_dtype, approx_recip):
    ki = pl.program_id(2)

    @pl.when(ki == 0)
    def _init():
        m_ref[...] = jnp.full(m_ref.shape, -jnp.inf, jnp.float32)
        l_ref[...] = jnp.zeros(l_ref.shape, jnp.float32)
        acc_ref[...] = jnp.zeros(acc_ref.shape, jnp.float32)

    q = q_ref[0, 0]                              # (heads, tq, dk)  compute dtype
    k = k_ref[0, 0]                              # (heads, tk, dk)
    v = v_ref[0, 0]                              # (heads, tk, dk)

    # Batched scores for every head; 1/sqrt(dk) already folded into Wq/bq.
    s = jnp.einsum('hqd,hkd->hqk', q, k, preferred_element_type=jnp.float32)

    m_prev = m_ref[...]                          # (heads, tq, 1) f32
    m_new = jnp.maximum(m_prev, s.max(axis=-1, keepdims=True))
    alpha = jnp.exp(m_prev - m_new)
    # exp in the MXU-operand dtype (bf16 on v6e/v7x -> EUP relief, no extra cast
    # before the PV matmul); the row-sum and accumulation stay f32.
    p = jnp.exp((s - m_new).astype(compute_dtype))                # (heads, tq, tk)
    l_ref[...] = alpha * l_ref[...] + jnp.sum(
        p.astype(jnp.float32), axis=-1, keepdims=True)
    acc_ref[...] = alpha * acc_ref[...] + jnp.einsum(
        'hqk,hkd->hqd', p, v, preferred_element_type=jnp.float32)
    m_ref[...] = m_new

    @pl.when(ki == pl.num_programs(2) - 1)
    def _finalize():
        heads, tq, dk = acc_ref.shape
        dmodel = wo_ref.shape[-1]
        inv_l = pl.reciprocal(l_ref[...], approx=approx_recip)    # EUP when approx
        o = (acc_ref[...] * inv_l).astype(compute_dtype)          # (heads, tq, dk)
        # ONE (heads*tq, dk) @ (dk, dmodel) matmul instead of `heads` small dots.
        y = jnp.dot(o.reshape(heads * tq, dk), wo_ref[...],
                    preferred_element_type=jnp.float32)
        y = y.reshape(heads, tq, dmodel) + kbo_ref[...][:, None, :]
        out_ref[0] = y.astype(out_ref.dtype)                      # lane-dense store


def multiple_branch_attention(query, key, value, params, *,
                              compute_dtype=None, out_dtype=None,
                              approx_reciprocal=True):
    """Forward pass of MoutipleBranchAttention (eval mode, mask=None)."""
    bs, seq, dmodel = query.shape
    heads = params["kscale"].shape[1]
    assert dmodel % heads == 0, "dmodel must be divisible by heads"
    dk = dmodel // heads
    if compute_dtype is None:
        # bf16 MXU operands (f32 accumulation) by default for f32 inputs — the fast
        # path on v6e/v7x.  Pass jnp.float32 explicitly for strict parity.
        compute_dtype = jnp.bfloat16 if query.dtype == jnp.float32 else query.dtype
    compute_dtype = jnp.dtype(compute_dtype)
    out_dtype = jnp.dtype(out_dtype if out_dtype is not None else query.dtype)
    f32 = jnp.float32

    # ---- host-side weight folding (tiny tensors, exact linear rescalings) -----
    scale = 1.0 / math.sqrt(dk)
    ks = params["kscale"].astype(f32).reshape(heads)              # (heads,)
    ks_cols = jnp.repeat(ks, dk)                                  # per output column
    wq = params["wq"].astype(f32) * scale                         # fold 1/sqrt(dk)
    bq = params["bq"].astype(f32) * scale
    wk = params["wk"].astype(f32)
    bk = params["bk"].astype(f32)
    wv = params["wv"].astype(f32) * ks_cols[None, :]              # fold branch scale k
    bv = params["bv"].astype(f32) * ks_cols[None, :]
    w_all = jnp.stack([wq, wk, wv]).astype(compute_dtype)         # (3, dmodel, dmodel)
    b_all = jnp.stack([bq, bk, bv])                               # (3, 1, dmodel) f32
    wo = params["wo"].astype(compute_dtype)                       # (dk, dmodel)
    kbo = ks[:, None] * params["bo"].astype(f32)                  # (heads, dmodel) f32

    cbytes = compute_dtype.itemsize
    xbytes = jnp.dtype(query.dtype).itemsize
    obytes = out_dtype.itemsize
    vmem_cap = _vmem_capacity_bytes()
    vmem_ceiling = int(0.82 * vmem_cap)
    align = 16 if cbytes == 2 else 8

    # ---- kernel 1: fused, head-major QKV projection ---------------------------
    ts = _pick_tile(seq, cap=256, align=align)
    # Column (head-group) tile for the stacked weights: 128-lane aligned (or the
    # full width) and double-buffered pair within ~40% of the VMEM budget.
    divisors = [d for d in range(1, heads + 1) if heads % d == 0]
    legal = [d for d in divisors if (d * dk) % 128 == 0 or d * dk == dmodel]
    fitting = [d for d in legal
               if 2 * _padded_bytes((3, dmodel, d * dk), cbytes) <= 0.4 * vmem_ceiling]
    hc = max(fitting) if fitting else min(legal)
    tn = hc * dk
    n_col = heads // hc

    est1 = (3 * 2 * _padded_bytes((ts, dmodel), xbytes)     # q/k/v tiles, double buffered
            + 2 * _padded_bytes((3, dmodel, tn), cbytes)    # stacked weight tile
            + 2 * _padded_bytes((3, 1, tn), 4)              # bias tile
            + 2 * _padded_bytes((3, hc, ts, dk), cbytes)    # head-major output tile
            + 3 * _padded_bytes((ts, tn), 4))               # f32 intermediates headroom

    qkv = pl.pallas_call(
        partial(_qkv_proj_kernel, hc=hc, dk=dk, compute_dtype=compute_dtype),
        out_shape=jax.ShapeDtypeStruct((3, bs, heads, seq, dk), compute_dtype),
        grid_spec=pltpu.PrefetchScalarGridSpec(
            num_scalar_prefetch=0,
            grid=(n_col, bs, seq // ts),
            in_specs=[
                pl.BlockSpec((1, ts, dmodel), lambda hg, b, s: (b, s, 0)),      # query
                pl.BlockSpec((1, ts, dmodel), lambda hg, b, s: (b, s, 0)),      # key
                pl.BlockSpec((1, ts, dmodel), lambda hg, b, s: (b, s, 0)),      # value
                pl.BlockSpec((3, dmodel, tn), lambda hg, b, s: (0, 0, hg)),     # w_all
                pl.BlockSpec((3, 1, tn), lambda hg, b, s: (0, 0, hg)),          # b_all
            ],
            out_specs=pl.BlockSpec((3, 1, hc, ts, dk),
                                   lambda hg, b, s: (0, b, hg, s, 0)),
        ),
        compiler_params=pltpu.CompilerParams(
            dimension_semantics=("parallel", "parallel", "parallel"),
            vmem_limit_bytes=_vmem_limit(est1, vmem_cap)),
    )(query, key, value, w_all, b_all)

    # ---- kernel 2: flash attention + Wo + branch bias -------------------------
    # The same stacked (3, bs, heads, seq, dk) array is passed three times with
    # different index_maps (no host-side slicing/copies).
    attn_cap = 256 if vmem_ceiling >= 80 * 2 ** 20 else 128   # smaller tiles on v7x
    tq = _pick_tile(seq, cap=attn_cap, align=align)
    tk = _pick_tile(seq, cap=attn_cap, align=align)

    est2 = (2 * _padded_bytes((heads, tq, dk), cbytes)       # q tile
            + 4 * _padded_bytes((heads, tk, dk), cbytes)     # k, v tiles
            + 2 * _padded_bytes((dk, dmodel), cbytes)        # wo
            + 2 * _padded_bytes((heads, dmodel), 4)          # k*bo
            + 2 * _padded_bytes((heads, tq, dmodel), obytes) # output tile
            + 2 * _padded_bytes((heads, tq, 1), 4)           # m, l scratch
            + _padded_bytes((heads, tq, dk), 4)              # acc scratch
            + 3 * _padded_bytes((heads, tq, tk), 4)          # scores / p intermediates
            + 2 * _padded_bytes((heads, tq, dmodel), 4))     # finalize intermediates

    out = pl.pallas_call(
        partial(_flash_attn_kernel, compute_dtype=compute_dtype,
                approx_recip=approx_reciprocal),
        out_shape=jax.ShapeDtypeStruct((bs, heads, seq, dmodel), out_dtype),
        grid_spec=pltpu.PrefetchScalarGridSpec(
            num_scalar_prefetch=0,
            grid=(bs, seq // tq, seq // tk),
            in_specs=[
                pl.BlockSpec((1, 1, heads, tq, dk),
                             lambda b, qi, ki: (0, b, 0, qi, 0)),                # q
                pl.BlockSpec((1, 1, heads, tk, dk),
                             lambda b, qi, ki: (1, b, 0, ki, 0)),                # k
                pl.BlockSpec((1, 1, heads, tk, dk),
                             lambda b, qi, ki: (2, b, 0, ki, 0)),                # v
                pl.BlockSpec((dk, dmodel), lambda b, qi, ki: (0, 0)),            # wo
                pl.BlockSpec((heads, dmodel), lambda b, qi, ki: (0, 0)),         # k*bo
            ],
            out_specs=pl.BlockSpec((1, heads, tq, dmodel),
                                   lambda b, qi, ki: (b, 0, qi, 0)),
            scratch_shapes=[
                pltpu.VMEM((heads, tq, 1), jnp.float32),   # running max
                pltpu.VMEM((heads, tq, 1), jnp.float32),   # running sum
                pltpu.VMEM((heads, tq, dk), jnp.float32),  # output accumulator
            ],
        ),
        compiler_params=pltpu.CompilerParams(
            dimension_semantics=("parallel", "parallel", "arbitrary"),
            vmem_limit_bytes=_vmem_limit(est2, vmem_cap)),
    )(qkv, qkv, qkv, wo, kbo)
    return out


def reference(query, key, value, params):
    """Pure-JAX reference reproducing the PyTorch forward (eval mode, mask=None)."""
    bs, seq, dmodel = query.shape
    heads = params["kscale"].shape[1]
    dk = dmodel // heads

    def proj(x, w, b):
        return x @ w + b[0]

    def split(x):
        return x.reshape(bs, seq, heads, dk).transpose(0, 2, 1, 3)

    q = split(proj(query, params["wq"], params["bq"]))
    k = split(proj(key, params["wk"], params["bk"]))
    v = split(proj(value, params["wv"], params["bv"]))
    s = jnp.einsum('bhqd,bhkd->bhqk', q, k) / math.sqrt(dk)
    p = jax.nn.softmax(s, axis=-1)
    o = jnp.einsum('bhqk,bhkd->bhqd', p, v)
    o = o @ params["wo"] + params["bo"][0]
    o = o * params["kscale"][0][None, :, None, None]
    return o


if __name__ == "__main__":
    BS, SEQ, DMODEL, HEADS = 2, 8, 32, 4
    DK = DMODEL // HEADS

    root = jax.random.PRNGKey(0)
    keys = jax.random.split(root, 12)
    s = 0.1
    params = {
        "wq": jax.random.normal(keys[0], (DMODEL, DMODEL), jnp.float32) * s,
        "bq": jax.random.normal(keys[1], (1, DMODEL), jnp.float32) * s,
        "wk": jax.random.normal(keys[2], (DMODEL, DMODEL), jnp.float32) * s,
        "bk": jax.random.normal(keys[3], (1, DMODEL), jnp.float32) * s,
        "wv": jax.random.normal(keys[4], (DMODEL, DMODEL), jnp.float32) * s,
        "bv": jax.random.normal(keys[5], (1, DMODEL), jnp.float32) * s,
        "wo": jax.random.normal(keys[6], (DK, DMODEL), jnp.float32) * s,
        "bo": jax.random.normal(keys[7], (1, DMODEL), jnp.float32) * s,
        "kscale": jax.random.normal(keys[8], (1, HEADS), jnp.float32),
    }
    query = jax.random.normal(keys[9], (BS, SEQ, DMODEL), jnp.float32)
    key_in = jax.random.normal(keys[10], (BS, SEQ, DMODEL), jnp.float32)
    value = jax.random.normal(keys[11], (BS, SEQ, DMODEL), jnp.float32)

    ref = reference(query, key_in, value, params)

    # f32 MXU-operand path with exact reciprocal — parity check.
    out_f32 = multiple_branch_attention(query, key_in, value, params,
                                        compute_dtype=jnp.float32,
                                        approx_reciprocal=False)
    jax.block_until_ready(out_f32)
    assert out_f32.shape == (BS, HEADS, SEQ, DMODEL), out_f32.shape
    err32 = float(jnp.max(jnp.abs(out_f32 - ref)))
    assert jnp.allclose(out_f32, ref, rtol=5e-3, atol=5e-3), err32

    # bf16 MXU-operand path with bf16 exp and bf16 writeback — the v6e/v7x config.
    out_bf16 = multiple_branch_attention(query, key_in, value, params,
                                         compute_dtype=jnp.bfloat16,
                                         out_dtype=jnp.bfloat16)
    jax.block_until_ready(out_bf16)
    err16 = float(jnp.max(jnp.abs(out_bf16.astype(jnp.float32) - ref)))
    assert jnp.allclose(out_bf16.astype(jnp.float32), ref, rtol=6e-2, atol=6e-2), err16

    print("KERNEL_OK")
</pallas_src>

<mosaic_0001>
module attributes {stable_mosaic.version = 11 : i64} {
  func.func @_qkv_proj_kernel(%arg0: i32, %arg1: i32, %arg2: i32, %arg3: memref<1x8x32xf32, #tpu.memory_space<vmem>>, %arg4: memref<1x8x32xf32, #tpu.memory_space<vmem>>, %arg5: memref<1x8x32xf32, #tpu.memory_space<vmem>>, %arg6: memref<3x32x32xf32, #tpu.memory_space<vmem>>, %arg7: memref<3x1x32xf32, #tpu.memory_space<vmem>>, %arg8: memref<3x1x4x8x8xf32, #tpu.memory_space<vmem>>) attributes {dimension_semantics = [#tpu.dimension_semantics<parallel>, #tpu.dimension_semantics<parallel>, #tpu.dimension_semantics<parallel>], iteration_bounds = array<i64: 1, 2, 1>, scalar_prefetch = 0 : i64, scratch_operands = 0 : i64, tpu.core_type = #tpu.core_type<tc>, window_params = [{transform_indices = @transform_0, window_bounds = array<i64: 1, 8, 32>}, {transform_indices = @transform_1, window_bounds = array<i64: 1, 8, 32>}, {transform_indices = @transform_2, window_bounds = array<i64: 1, 8, 32>}, {transform_indices = @transform_3, window_bounds = array<i64: 3, 32, 32>}, {transform_indices = @transform_4, window_bounds = array<i64: 3, 1, 32>}, {transform_indices = @transform_5, window_bounds = array<i64: 3, 1, 4, 8, 8>}]} {
    %c0 = arith.constant 0 : index
    %c0_0 = arith.constant 0 : index
    %c0_1 = arith.constant 0 : index
    %0 = vector.load %arg3[%c0, %c0_0, %c0_1] : memref<1x8x32xf32, #tpu.memory_space<vmem>>, vector<1x8x32xf32>
    %1 = vector.shape_cast %0 : vector<1x8x32xf32> to vector<8x32xf32>
    %c0_2 = arith.constant 0 : index
    %c0_3 = arith.constant 0 : index
    %c0_4 = arith.constant 0 : index
    %2 = vector.load %arg6[%c0_2, %c0_3, %c0_4] : memref<3x32x32xf32, #tpu.memory_space<vmem>>, vector<1x32x32xf32>
    %3 = vector.shape_cast %2 : vector<1x32x32xf32> to vector<32x32xf32>
    %cst = arith.constant dense<0.000000e+00> : vector<8x32xf32>
    %4 = tpu.matmul %1, %3, %cst {dimension_numbers = #tpu.dot_dimension_numbers<[1], [0], [0], [1], [0, 0, 1, 1], [], []>} : vector<8x32xf32>, vector<32x32xf32>, vector<8x32xf32> -> vector<8x32xf32>
    %c0_5 = arith.constant 0 : index
    %c0_6 = arith.constant 0 : index
    %c0_7 = arith.constant 0 : index
    %5 = vector.load %arg7[%c0_5, %c0_6, %c0_7] : memref<3x1x32xf32, #tpu.memory_space<vmem>>, vector<1x1x32xf32>
    %6 = vector.shape_cast %5 : vector<1x1x32xf32> to vector<1x32xf32>
    %7 = vector.broadcast %6 : vector<1x32xf32> to vector<8x32xf32>
    %8 = arith.addf %4, %7 : vector<8x32xf32>
    %9 = vector.extract_strided_slice %8 {offsets = [0, 0], sizes = [8, 8], strides = [1, 1]} : vector<8x32xf32> to vector<8x8xf32>
    %c0_8 = arith.constant 0 : index
    %c0_9 = arith.constant 0 : index
    %c0_10 = arith.constant 0 : index
    %c0_11 = arith.constant 0 : index
    %c0_12 = arith.constant 0 : index
    %10 = vector.load %arg8[%c0_8, %c0_9, %c0_10, %c0_11, %c0_12] : memref<3x1x4x8x8xf32, #tpu.memory_space<vmem>>, vector<1x1x1x8x8xf32>
    %11 = vector.shape_cast %10 : vector<1x1x1x8x8xf32> to vector<8x8xf32>
    %12 = vector.shape_cast %9 : vector<8x8xf32> to vector<1x1x1x8x8xf32>
    tpu.vector_store %arg8[%c0_8, %c0_9, %c0_10, %c0_11, %c0_12], %12 {strides = array<i32>} : memref<3x1x4x8x8xf32, #tpu.memory_space<vmem>>, vector<1x1x1x8x8xf32>,
    %13 = vector.extract_strided_slice %8 {offsets = [0, 8], sizes = [8, 8], strides = [1, 1]} : vector<8x32xf32> to vector<8x8xf32>
    %c0_13 = arith.constant 0 : index
    %c0_14 = arith.constant 0 : index
    %c1 = arith.constant 1 : index
    %c0_15 = arith.constant 0 : index
    %c0_16 = arith.constant 0 : index
    %14 = vector.load %arg8[%c0_13, %c0_14, %c1, %c0_15, %c0_16] : memref<3x1x4x8x8xf32, #tpu.memory_space<vmem>>, vector<1x1x1x8x8xf32>
    %15 = vector.shape_cast %14 : vector<1x1x1x8x8xf32> to vector<8x8xf32>
    %16 = vector.shape_cast %13 : vector<8x8xf32> to vector<1x1x1x8x8xf32>
    tpu.vector_store %arg8[%c0_13, %c0_14, %c1, %c0_15, %c0_16], %16 {strides = array<i32>} : memref<3x1x4x8x8xf32, #tpu.memory_space<vmem>>, vector<1x1x1x8x8xf32>,
    %17 = vector.extract_strided_slice %8 {offsets = [0, 16], sizes = [8, 8], strides = [1, 1]} : vector<8x32xf32> to vector<8x8xf32>
    %c0_17 = arith.constant 0 : index
    %c0_18 = arith.constant 0 : index
    %c2 = arith.constant 2 : index
    %c0_19 = arith.constant 0 : index
    %c0_20 = arith.constant 0 : index
    %18 = vector.load %arg8[%c0_17, %c0_18, %c2, %c0_19, %c0_20] : memref<3x1x4x8x8xf32, #tpu.memory_space<vmem>>, vector<1x1x1x8x8xf32>
    %19 = vector.shape_cast %18 : vector<1x1x1x8x8xf32> to vector<8x8xf32>
    %20 = vector.shape_cast %17 : vector<8x8xf32> to vector<1x1x1x8x8xf32>
    tpu.vector_store %arg8[%c0_17, %c0_18, %c2, %c0_19, %c0_20], %20 {strides = array<i32>} : memref<3x1x4x8x8xf32, #tpu.memory_space<vmem>>, vector<1x1x1x8x8xf32>,
    %21 = vector.extract_strided_slice %8 {offsets = [0, 24], sizes = [8, 8], strides = [1, 1]} : vector<8x32xf32> to vector<8x8xf32>
    %c0_21 = arith.constant 0 : index
    %c0_22 = arith.constant 0 : index
    %c3 = arith.constant 3 : index
    %c0_23 = arith.constant 0 : index
    %c0_24 = arith.constant 0 : index
    %22 = vector.load %arg8[%c0_21, %c0_22, %c3, %c0_23, %c0_24] : memref<3x1x4x8x8xf32, #tpu.memory_space<vmem>>, vector<1x1x1x8x8xf32>
    %23 = vector.shape_cast %22 : vector<1x1x1x8x8xf32> to vector<8x8xf32>
    %24 = vector.shape_cast %21 : vector<8x8xf32> to vector<1x1x1x8x8xf32>
    tpu.vector_store %arg8[%c0_21, %c0_22, %c3, %c0_23, %c0_24], %24 {strides = array<i32>} : memref<3x1x4x8x8xf32, #tpu.memory_space<vmem>>, vector<1x1x1x8x8xf32>,
    %c0_25 = arith.constant 0 : index
    %c0_26 = arith.constant 0 : index
    %c0_27 = arith.constant 0 : index
    %25 = vector.load %arg4[%c0_25, %c0_26, %c0_27] : memref<1x8x32xf32, #tpu.memory_space<vmem>>, vector<1x8x32xf32>
    %26 = vector.shape_cast %25 : vector<1x8x32xf32> to vector<8x32xf32>
    %c1_28 = arith.constant 1 : index
    %c0_29 = arith.constant 0 : index
    %c0_30 = arith.constant 0 : index
    %27 = vector.load %arg6[%c1_28, %c0_29, %c0_30] : memref<3x32x32xf32, #tpu.memory_space<vmem>>, vector<1x32x32xf32>
    %28 = vector.shape_cast %27 : vector<1x32x32xf32> to vector<32x32xf32>
    %cst_31 = arith.constant dense<0.000000e+00> : vector<8x32xf32>
    %29 = tpu.matmul %26, %28, %cst_31 {dimension_numbers = #tpu.dot_dimension_numbers<[1], [0], [0], [1], [0, 0, 1, 1], [], []>} : vector<8x32xf32>, vector<32x32xf32>, vector<8x32xf32> -> vector<8x32xf32>
    %c1_32 = arith.constant 1 : index
    %c0_33 = arith.constant 0 : index
    %c0_34 = arith.constant 0 : index
    %30 = vector.load %arg7[%c1_32, %c0_33, %c0_34] : memref<3x1x32xf32, #tpu.memory_space<vmem>>, vector<1x1x32xf32>
    %31 = vector.shape_cast %30 : vector<1x1x32xf32> to vector<1x32xf32>
    %32 = vector.broadcast %31 : vector<1x32xf32> to vector<8x32xf32>
    %33 = arith.addf %29, %32 : vector<8x32xf32>
    %34 = vector.extract_strided_slice %33 {offsets = [0, 0], sizes = [8, 8], strides = [1, 1]} : vector<8x32xf32> to vector<8x8xf32>
    %c1_35 = arith.constant 1 : index
    %c0_36 = arith.constant 0 : index
    %c0_37 = arith.constant 0 : index
    %c0_38 = arith.constant 0 : index
    %c0_39 = arith.constant 0 : index
    %35 = vector.load %arg8[%c1_35, %c0_36, %c0_37, %c0_38, %c0_39] : memref<3x1x4x8x8xf32, #tpu.memory_space<vmem>>, vector<1x1x1x8x8xf32>
    %36 = vector.shape_cast %35 : vector<1x1x1x8x8xf32> to vector<8x8xf32>
    %37 = vector.shape_cast %34 : vector<8x8xf32> to vector<1x1x1x8x8xf32>
    tpu.vector_store %arg8[%c1_35, %c0_36, %c0_37, %c0_38, %c0_39], %37 {strides = array<i32>} : memref<3x1x4x8x8xf32, #tpu.memory_space<vmem>>, vector<1x1x1x8x8xf32>,
    %38 = vector.extract_strided_slice %33 {offsets = [0, 8], sizes = [8, 8], strides = [1, 1]} : vector<8x32xf32> to vector<8x8xf32>
    %c1_40 = arith.constant 1 : index
    %c0_41 = arith.constant 0 : index
    %c1_42 = arith.constant 1 : index
    %c0_43 = arith.constant 0 : index
    %c0_44 = arith.constant 0 : index
    %39 = vector.load %arg8[%c1_40, %c0_41, %c1_42, %c0_43, %c0_44] : memref<3x1x4x8x8xf32, #tpu.memory_space<vmem>>, vector<1x1x1x8x8xf32>
    %40 = vector.shape_cast %39 : vector<1x1x1x8x8xf32> to vector<8x8xf32>
    %41 = vector.shape_cast %38 : vector<8x8xf32> to vector<1x1x1x8x8xf32>
    tpu.vector_store %arg8[%c1_40, %c0_41, %c1_42, %c0_43, %c0_44], %41 {strides = array<i32>} : memref<3x1x4x8x8xf32, #tpu.memory_space<vmem>>, vector<1x1x1x8x8xf32>,
    %42 = vector.extract_strided_slice %33 {offsets = [0, 16], sizes = [8, 8], strides = [1, 1]} : vector<8x32xf32> to vector<8x8xf32>
    %c1_45 = arith.constant 1 : index
    %c0_46 = arith.constant 0 : index
    %c2_47 = arith.constant 2 : index
    %c0_48 = arith.constant 0 : index
    %c0_49 = arith.constant 0 : index
    %43 = vector.load %arg8[%c1_45, %c0_46, %c2_47, %c0_48, %c0_49] : memref<3x1x4x8x8xf32, #tpu.memory_space<vmem>>, vector<1x1x1x8x8xf32>
    %44 = vector.shape_cast %43 : vector<1x1x1x8x8xf32> to vector<8x8xf32>
    %45 = vector.shape_cast %42 : vector<8x8xf32> to vector<1x1x1x8x8xf32>
    tpu.vector_store %arg8[%c1_45, %c0_46, %c2_47, %c0_48, %c0_49], %45 {strides = array<i32>} : memref<3x1x4x8x8xf32, #tpu.memory_space<vmem>>, vector<1x1x1x8x8xf32>,
    %46 = vector.extract_strided_slice %33 {offsets = [0, 24], sizes = [8, 8], strides = [1, 1]} : vector<8x32xf32> to vector<8x8xf32>
    %c1_50 = arith.constant 1 : index
    %c0_51 = arith.constant 0 : index
    %c3_52 = arith.constant 3 : index
    %c0_53 = arith.constant 0 : index
    %c0_54 = arith.constant 0 : index
    %47 = vector.load %arg8[%c1_50, %c0_51, %c3_52, %c0_53, %c0_54] : memref<3x1x4x8x8xf32, #tpu.memory_space<vmem>>, vector<1x1x1x8x8xf32>
    %48 = vector.shape_cast %47 : vector<1x1x1x8x8xf32> to vector<8x8xf32>
    %49 = vector.shape_cast %46 : vector<8x8xf32> to vector<1x1x1x8x8xf32>
    tpu.vector_store %arg8[%c1_50, %c0_51, %c3_52, %c0_53, %c0_54], %49 {strides = array<i32>} : memref<3x1x4x8x8xf32, #tpu.memory_space<vmem>>, vector<1x1x1x8x8xf32>,
    %c0_55 = arith.constant 0 : index
    %c0_56 = arith.constant 0 : index
    %c0_57 = arith.constant 0 : index
    %50 = vector.load %arg5[%c0_55, %c0_56, %c0_57] : memref<1x8x32xf32, #tpu.memory_space<vmem>>, vector<1x8x32xf32>
    %51 = vector.shape_cast %50 : vector<1x8x32xf32> to vector<8x32xf32>
    %c2_58 = arith.constant 2 : index
    %c0_59 = arith.constant 0 : index
    %c0_60 = arith.constant 0 : index
    %52 = vector.load %arg6[%c2_58, %c0_59, %c0_60] : memref<3x32x32xf32, #tpu.memory_space<vmem>>, vector<1x32x32xf32>
    %53 = vector.shape_cast %52 : vector<1x32x32xf32> to vector<32x32xf32>
    %cst_61 = arith.constant dense<0.000000e+00> : vector<8x32xf32>
    %54 = tpu.matmul %51, %53, %cst_61 {dimension_numbers = #tpu.dot_dimension_numbers<[1], [0], [0], [1], [0, 0, 1, 1], [], []>} : vector<8x32xf32>, vector<32x32xf32>, vector<8x32xf32> -> vector<8x32xf32>
    %c2_62 = arith.constant 2 : index
    %c0_63 = arith.constant 0 : index
    %c0_64 = arith.constant 0 : index
    %55 = vector.load %arg7[%c2_62, %c0_63, %c0_64] : memref<3x1x32xf32, #tpu.memory_space<vmem>>, vector<1x1x32xf32>
    %56 = vector.shape_cast %55 : vector<1x1x32xf32> to vector<1x32xf32>
    %57 = vector.broadcast %56 : vector<1x32xf32> to vector<8x32xf32>
    %58 = arith.addf %54, %57 : vector<8x32xf32>
    %59 = vector.extract_strided_slice %58 {offsets = [0, 0], sizes = [8, 8], strides = [1, 1]} : vector<8x32xf32> to vector<8x8xf32>
    %c2_65 = arith.constant 2 : index
    %c0_66 = arith.constant 0 : index
    %c0_67 = arith.constant 0 : index
    %c0_68 = arith.constant 0 : index
    %c0_69 = arith.constant 0 : index
    %60 = vector.load %arg8[%c2_65, %c0_66, %c0_67, %c0_68, %c0_69] : memref<3x1x4x8x8xf32, #tpu.memory_space<vmem>>, vector<1x1x1x8x8xf32>
    %61 = vector.shape_cast %60 : vector<1x1x1x8x8xf32> to vector<8x8xf32>
    %62 = vector.shape_cast %59 : vector<8x8xf32> to vector<1x1x1x8x8xf32>
    tpu.vector_store %arg8[%c2_65, %c0_66, %c0_67, %c0_68, %c0_69], %62 {strides = array<i32>} : memref<3x1x4x8x8xf32, #tpu.memory_space<vmem>>, vector<1x1x1x8x8xf32>,
    %63 = vector.extract_strided_slice %58 {offsets = [0, 8], sizes = [8, 8], strides = [1, 1]} : vector<8x32xf32> to vector<8x8xf32>
    %c2_70 = arith.constant 2 : index
    %c0_71 = arith.constant 0 : index
    %c1_72 = arith.constant 1 : index
    %c0_73 = arith.constant 0 : index
    %c0_74 = arith.constant 0 : index
    %64 = vector.load %arg8[%c2_70, %c0_71, %c1_72, %c0_73, %c0_74] : memref<3x1x4x8x8xf32, #tpu.memory_space<vmem>>, vector<1x1x1x8x8xf32>
    %65 = vector.shape_cast %64 : vector<1x1x1x8x8xf32> to vector<8x8xf32>
    %66 = vector.shape_cast %63 : vector<8x8xf32> to vector<1x1x1x8x8xf32>
    tpu.vector_store %arg8[%c2_70, %c0_71, %c1_72, %c0_73, %c0_74], %66 {strides = array<i32>} : memref<3x1x4x8x8xf32, #tpu.memory_space<vmem>>, vector<1x1x1x8x8xf32>,
    %67 = vector.extract_strided_slice %58 {offsets = [0, 16], sizes = [8, 8], strides = [1, 1]} : vector<8x32xf32> to vector<8x8xf32>
    %c2_75 = arith.constant 2 : index
    %c0_76 = arith.constant 0 : index
    %c2_77 = arith.constant 2 : index
    %c0_78 = arith.constant 0 : index
    %c0_79 = arith.constant 0 : index
    %68 = vector.load %arg8[%c2_75, %c0_76, %c2_77, %c0_78, %c0_79] : memref<3x1x4x8x8xf32, #tpu.memory_space<vmem>>, vector<1x1x1x8x8xf32>
    %69 = vector.shape_cast %68 : vector<1x1x1x8x8xf32> to vector<8x8xf32>
    %70 = vector.shape_cast %67 : vector<8x8xf32> to vector<1x1x1x8x8xf32>
    tpu.vector_store %arg8[%c2_75, %c0_76, %c2_77, %c0_78, %c0_79], %70 {strides = array<i32>} : memref<3x1x4x8x8xf32, #tpu.memory_space<vmem>>, vector<1x1x1x8x8xf32>,
    %71 = vector.extract_strided_slice %58 {offsets = [0, 24], sizes = [8, 8], strides = [1, 1]} : vector<8x32xf32> to vector<8x8xf32>
    %c2_80 = arith.constant 2 : index
    %c0_81 = arith.constant 0 : index
    %c3_82 = arith.constant 3 : index
    %c0_83 = arith.constant 0 : index
    %c0_84 = arith.constant 0 : index
    %72 = vector.load %arg8[%c2_80, %c0_81, %c3_82, %c0_83, %c0_84] : memref<3x1x4x8x8xf32, #tpu.memory_space<vmem>>, vector<1x1x1x8x8xf32>
    %73 = vector.shape_cast %72 : vector<1x1x1x8x8xf32> to vector<8x8xf32>
    %74 = vector.shape_cast %71 : vector<8x8xf32> to vector<1x1x1x8x8xf32>
    tpu.vector_store %arg8[%c2_80, %c0_81, %c3_82, %c0_83, %c0_84], %74 {strides = array<i32>} : memref<3x1x4x8x8xf32, #tpu.memory_space<vmem>>, vector<1x1x1x8x8xf32>,
    return
  }
  func.func @transform_0(%arg0: i32, %arg1: i32, %arg2: i32) -> (i32, i32, i32) {
    %c0_i32 = arith.constant 0 : i32
    %c0_i32_0 = arith.constant 0 : i32
    return %arg1, %arg2, %c0_i32 : i32, i32, i32
  }
  func.func @transform_1(%arg0: i32, %arg1: i32, %arg2: i32) -> (i32, i32, i32) {
    %c0_i32 = arith.constant 0 : i32
    %c0_i32_0 = arith.constant 0 : i32
    return %arg1, %arg2, %c0_i32 : i32, i32, i32
  }
  func.func @transform_2(%arg0: i32, %arg1: i32, %arg2: i32) -> (i32, i32, i32) {
    %c0_i32 = arith.constant 0 : i32
    %c0_i32_0 = arith.constant 0 : i32
    return %arg1, %arg2, %c0_i32 : i32, i32, i32
  }
  func.func @transform_3(%arg0: i32, %arg1: i32, %arg2: i32) -> (i32, i32, i32) {
    %c0_i32 = arith.constant 0 : i32
    %c0_i32_0 = arith.constant 0 : i32
    %c0_i32_1 = arith.constant 0 : i32
    return %c0_i32, %c0_i32_0, %arg0 : i32, i32, i32
  }
  func.func @transform_4(%arg0: i32, %arg1: i32, %arg2: i32) -> (i32, i32, i32) {
    %c0_i32 = arith.constant 0 : i32
    %c0_i32_0 = arith.constant 0 : i32
    %c0_i32_1 = arith.constant 0 : i32
    return %c0_i32, %c0_i32_0, %arg0 : i32, i32, i32
  }
  func.func @transform_5(%arg0: i32, %arg1: i32, %arg2: i32) -> (i32, i32, i32, i32, i32) {
    %c0_i32 = arith.constant 0 : i32
    %c0_i32_0 = arith.constant 0 : i32
    %c0_i32_1 = arith.constant 0 : i32
    return %c0_i32, %arg1, %arg0, %arg2, %c0_i32_0 : i32, i32, i32, i32, i32
  }
}

</mosaic_0001>

<llo_original>
// kernel: tpu_custom_call.1
$region0: #{tpu_custom_call.1}
  #allocation0 [shape = 'u32[]', space=smem, size = 0x4, offset = 0x4, fixed_abs, tag = 'smem constant byte address 0x4 - core index']
  #allocation1 [shape = 'u32[144,128]{1,0:T(1,128)}', space=vmem, size = 0x12000, scoped, tag = 'internal scratch']
  #allocation11 [shape = 's32[]', space=sflag, size = 0x4, offset = 0, fixed_abs, tag = 'sflag constant byte address 0x0 - dummy sync flag']
  %s0 = inlined_call_operand.hbm [shape: f32[2,8,32], index: 0, kind: input, shape index: {}]
  %s1 = inlined_call_operand.hbm [shape: f32[2,8,32], index: 1, kind: input, shape index: {}]
  %s2 = inlined_call_operand.hbm [shape: f32[2,8,32], index: 2, kind: input, shape index: {}]
  %s3 = inlined_call_operand.hbm [shape: f32[3,32,32], index: 3, kind: input, shape index: {}]
  %s4 = inlined_call_operand.vmem [shape: f32[3,1,32], index: 4, kind: input, shape index: {}]
  %s5 = inlined_call_operand.hbm [shape: f32[3,2,4,8,8], index: 5, kind: output, shape index: {}]
  %s6 = sld [smem:[#allocation0]]
  $region69: #{tpu_custom_call.1} parent=0
    _
  %s8 = ssub.s32 1, %s6
  %s9 = scalar_select 0, %s8, %s6
  $region1: #{tpu_custom_call.1} parent=0
    #allocation2 [shape = 'u8[8192]{0}', space=vmem, size = 0x2000, scoped, tag = 'input window, operand 0']
    #allocation3 [shape = 's32[2]{0}', space=sflag, size = 0x8, scoped, tag = 'scoped memory for tpu_custom_call.1']
    #allocation4 [shape = 's32[2]{0}', space=sflag, size = 0x8, scoped, tag = 'scoped memory for tpu_custom_call.1']
    #allocation5 [shape = 'u8[8192]{0}', space=vmem, size = 0x2000, scoped, tag = 'input window, operand 1']
    #allocation6 [shape = 's32[2]{0}', space=sflag, size = 0x8, scoped, tag = 'scoped memory for tpu_custom_call.1']
    #allocation7 [shape = 'u8[8192]{0}', space=vmem, size = 0x2000, scoped, tag = 'input window, operand 2']
    #allocation8 [shape = 'u8[49152]{0}', space=vmem, size = 0xc000, scoped, tag = 'input window, operand 3, single buffered']
    #allocation9 [shape = 's32[1]{0}', space=sflag, size = 0x4, scoped, tag = 'scoped memory for tpu_custom_call.1']
    #allocation10 [shape = 'u8[98304]{0}', space=vmem, size = 0x18000, scoped, tag = 'output window, operand 0']
    %10 = vsyncpa [#allocation3], 0
    %s11 = scalar_lea.sflag [#allocation3], 1
    %12 = vsyncpa %s11, 0
    %13 = vsyncpa [#allocation6], 0
    %s14 = scalar_lea.sflag [#allocation6], 1
    %15 = vsyncpa %s14, 0
    %16 = vsyncpa [#allocation9], 0
    %17 = vsyncpa [#allocation4], 0
    %s18 = scalar_lea.sflag [#allocation4], 1
    %19 = vsyncpa %s18, 0
    loop: start=0, step=1, limit=4
    $region2: #{tpu_custom_call.1} parent=1 // loop_pre_header
      _
    $region3: #{tpu_custom_call.1} parent=1 // loop_header
      %s21 = sphi 0, %s25
      %p22 = scmp.ge.s32.totalorder %s21, 4
      %s28 = sphi 0, %s47
      %s29 = sphi 0, %s43
      %s30 = sphi 0, %s39
      %s31 = sphi 0, %s28
      %s32 = sphi 0, %s29
      %s33 = sphi 0, %s30
      %s34 = sphi 0, %s31
      %s35 = sphi 0, %s32
      %s36 = sphi 0, %s33
      %s52 = sphi 0, %s54
      %s55 = sphi 0, %s52
      %s56 = sphi 0, %s55
      %s72 = sphi 0, %s56
      %s80 = sphi 0, %s82
      %s83 = sphi 0, %s80
      %s84 = sphi 0, %s83
      %s100 = sphi 0, %s84
      %s108 = sphi 0, %s110
      %s111 = sphi 0, %s108
      %s112 = sphi 0, %s111
      %s128 = sphi 0, %s112
      %s134 = sphi 0, %s136
      %s137 = sphi 0, %s134
      %s138 = sphi 0, %s137
      %s154 = sphi 0, %s138
      %s160 = sphi 0, %s162
      %s163 = sphi 0, %s160
      %s164 = sphi 0, %s163
      %s180 = sphi 0, %s164
      %s190 = sphi 0, %s192
      %s193 = sphi 0, %s190
      %s194 = sphi 0, %s193
      %s210 = sphi 0, %s194
    $region4: #{tpu_custom_call.1} parent=1 // loop_header_branch
      %24 = sbr.rel (%p22) target = $region8
    $region5: #{tpu_custom_call.1} parent=1 // loop_body
      %s26 = ssub.s32 %s21, 1
      %s27 = ssub.s32 %s21, 2
      %s37 = sadd.s32 1, %s30
      %p38 = scmp.ge.s32.totalorder %s37, 1
      %s39 = scalar_select %p38, 0, %s37
      %s40 = sadd.s32 1, %s29
      %s41 = scalar_select %p38, %s40, %s29
      %p42 = scmp.ge.s32.totalorder %s41, 2
      %s43 = scalar_select %p42, 0, %s41
      %s44 = sadd.s32 1, %s28
      %s45 = scalar_select %p42, %s44, %s28
      %p46 = scmp.ge.s32.totalorder %s45, 1
      %s47 = scalar_select %p46, 0, %s45
      %s48 = ssub.s32 %s29, %s43
      %s49 = ssub.s32 %s30, %s39
      %s50 = sor.u32 %s48, %s49
      %p51 = scmp.eq.s32.totalorder %s50, 0
      %s53 = sadd.s32 %s52, 1
      %s54 = scalar_select %p51, %s52, %s53
      %p57 = pneg %p51
      %p58 = scmp.eq.s32.totalorder %s21, 1
      %p59 = por %p57, %p58
      %p60 = scmp.ne.s32.totalorder %s52, %s55
      %p61 = scmp.eq.s32.totalorder %s21, 0
      %p62 = por %p60, %p61
      %p63 = scmp.ne.s32.totalorder %s52, %s55
      %p64 = scmp.eq.s32.totalorder %s26, 1
      %p65 = por %p63, %p64
      %p66 = scmp.ne.s32.totalorder %s55, %s56
      %p67 = scmp.eq.s32.totalorder %s26, 0
      %p68 = por %p66, %p67
      %p69 = scmp.ne.s32.totalorder %s55, %s56
      %p70 = scmp.eq.s32.totalorder %s27, 1
      %p71 = por %p69, %p70
      %p73 = scmp.ne.s32.totalorder %s56, %s72
      %p74 = scmp.eq.s32.totalorder %s27, 0
      %p75 = por %p73, %p74
      %s76 = ssub.s32 %s29, %s43
      %s77 = ssub.s32 %s30, %s39
      %s78 = sor.u32 %s76, %s77
      %p79 = scmp.eq.s32.totalorder %s78, 0
      %s81 = sadd.s32 %s80, 1
      %s82 = scalar_select %p79, %s80, %s81
      %p85 = pneg %p79
      %p86 = scmp.eq.s32.totalorder %s21, 1
      %p87 = por %p85, %p86
      %p88 = scmp.ne.s32.totalorder %s80, %s83
      %p89 = scmp.eq.s32.totalorder %s21, 0
      %p90 = por %p88, %p89
      %p91 = scmp.ne.s32.totalorder %s80, %s83
      %p92 = scmp.eq.s32.totalorder %s26, 1
      %p93 = por %p91, %p92
      %p94 = scmp.ne.s32.totalorder %s83, %s84
      %p95 = scmp.eq.s32.totalorder %s26, 0
      %p96 = por %p94, %p95
      %p97 = scmp.ne.s32.totalorder %s83, %s84
      %p98 = scmp.eq.s32.totalorder %s27, 1
      %p99 = por %p97, %p98
      %p101 = scmp.ne.s32.totalorder %s84, %s100
      %p102 = scmp.eq.s32.totalorder %s27, 0
      %p103 = por %p101, %p102
      %s104 = ssub.s32 %s29, %s43
      %s105 = ssub.s32 %s30, %s39
      %s106 = sor.u32 %s104, %s105
      %p107 = scmp.eq.s32.totalorder %s106, 0
      %s109 = sadd.s32 %s108, 1
      %s110 = scalar_select %p107, %s108, %s109
      %p113 = pneg %p107
      %p114 = scmp.eq.s32.totalorder %s21, 1
      %p115 = por %p113, %p114
      %p116 = scmp.ne.s32.totalorder %s108, %s111
      %p117 = scmp.eq.s32.totalorder %s21, 0
      %p118 = por %p116, %p117
      %p119 = scmp.ne.s32.totalorder %s108, %s111
      %p120 = scmp.eq.s32.totalorder %s26, 1
      %p121 = por %p119, %p120
      %p122 = scmp.ne.s32.totalorder %s111, %s112
      %p123 = scmp.eq.s32.totalorder %s26, 0
      %p124 = por %p122, %p123
      %p125 = scmp.ne.s32.totalorder %s111, %s112
      %p126 = scmp.eq.s32.totalorder %s27, 1
      %p127 = por %p125, %p126
      %p129 = scmp.ne.s32.totalorder %s112, %s128
      %p130 = scmp.eq.s32.totalorder %s27, 0
      %p131 = por %p129, %p130
      %s132 = ssub.s32 %s28, %s47
      %p133 = scmp.eq.s32.totalorder %s132, 0
      %s135 = sadd.s32 %s134, 1
      %s136 = scalar_select %p133, %s134, %s135
      %p139 = pneg %p133
      %p140 = scmp.eq.s32.totalorder %s21, 1
      %p141 = por %p139, %p140
      %p142 = scmp.ne.s32.totalorder %s134, %s137
      %p143 = scmp.eq.s32.totalorder %s21, 0
      %p144 = por %p142, %p143
      %p145 = scmp.ne.s32.totalorder %s134, %s137
      %p146 = scmp.eq.s32.totalorder %s26, 1
      %p147 = por %p145, %p146
      %p148 = scmp.ne.s32.totalorder %s137, %s138
      %p149 = scmp.eq.s32.totalorder %s26, 0
      %p150 = por %p148, %p149
      %p151 = scmp.ne.s32.totalorder %s137, %s138
      %p152 = scmp.eq.s32.totalorder %s27, 1
      %p153 = por %p151, %p152
      %p155 = scmp.ne.s32.totalorder %s138, %s154
      %p156 = scmp.eq.s32.totalorder %s27, 0
      %p157 = por %p155, %p156
      %s158 = ssub.s32 %s28, %s47
      %p159 = scmp.eq.s32.totalorder %s158, 0
      %s161 = sadd.s32 %s160, 1
      %s162 = scalar_select %p159, %s160, %s161
      %p165 = pneg %p159
      %p166 = scmp.eq.s32.totalorder %s21, 1
      %p167 = por %p165, %p166
      %p168 = scmp.ne.s32.totalorder %s160, %s163
      %p169 = scmp.eq.s32.totalorder %s21, 0
      %p170 = por %p168, %p169
      %p171 = scmp.ne.s32.totalorder %s160, %s163
      %p172 = scmp.eq.s32.totalorder %s26, 1
      %p173 = por %p171, %p172
      %p174 = scmp.ne.s32.totalorder %s163, %s164
      %p175 = scmp.eq.s32.totalorder %s26, 0
      %p176 = por %p174, %p175
      %p177 = scmp.ne.s32.totalorder %s163, %s164
      %p178 = scmp.eq.s32.totalorder %s27, 1
      %p179 = por %p177, %p178
      %p181 = scmp.ne.s32.totalorder %s164, %s180
      %p182 = scmp.eq.s32.totalorder %s27, 0
      %p183 = por %p181, %p182
      %s184 = ssub.s32 %s29, %s43
      %s185 = ssub.s32 %s28, %s47
      %s186 = sor.u32 %s184, %s185
      %s187 = ssub.s32 %s30, %s39
      %s188 = sor.u32 %s186, %s187
      %p189 = scmp.eq.s32.totalorder %s188, 0
      %s191 = sadd.s32 %s190, 1
      %s192 = scalar_select %p189, %s190, %s191
      %p195 = pneg %p189
      %p196 = scmp.eq.s32.totalorder %s21, 1
      %p197 = por %p195, %p196
      %p198 = scmp.ne.s32.totalorder %s190, %s193
      %p199 = scmp.eq.s32.totalorder %s21, 0
      %p200 = por %p198, %p199
      %p201 = scmp.ne.s32.totalorder %s190, %s193
      %p202 = scmp.eq.s32.totalorder %s26, 1
      %p203 = por %p201, %p202
      %p204 = scmp.ne.s32.totalorder %s193, %s194
      %p205 = scmp.eq.s32.totalorder %s26, 0
      %p206 = por %p204, %p205
      %p207 = scmp.ne.s32.totalorder %s193, %s194
      %p208 = scmp.eq.s32.totalorder %s27, 1
      %p209 = por %p207, %p208
      %p211 = scmp.ne.s32.totalorder %s194, %s210
      %p212 = scmp.eq.s32.totalorder %s27, 0
      %p213 = por %p211, %p212
      %p214 = scmp.le.s32.totalorder 1, %s21
      %p215 = scmp.lt.s32.totalorder %s21, 3
      %p216 = pnand %p214, %p215
      %p217 = pneg %p216
      // Predicated region
      $region9: #{tpu_custom_call.1} parent=5 // pred_check
        _
      $region10: #{tpu_custom_call.1} parent=5 // pred_check_branch
        %219 = sbr.rel (%p216) target = $region12
      $region11: #{tpu_custom_call.1} parent=5 // pred_region
        %s220 = ssub.s32 %s21, 1
        // Predicated region
        $region13: #{tpu_custom_call.1} parent=11 // pred_check
          %p221 = pneg %p150
        $region14: #{tpu_custom_call.1} parent=11 // pred_check_branch
          %223 = sbr.rel (%p221) target = $region16
        $region15: #{tpu_custom_call.1} parent=11 // pred_region
          %s225 = ssub.s32 1536, 1536
          %226 = vsyncadd [#allocation9], %s225
          %s227 = smul.addr %s31, 128
          %s228 = scalar_lea.hbm %s3, %s227
          %s229 = sshll.u32 [#allocation8], 4
          %s230 = int_to_ptr.vmem [resolvable:$true] %s229
          %235 = dma.hbm_to_vmem [thread:$0]  %s228, 1536, %s230, [#allocation9], 128, 128, 8
        $region16: #{tpu_custom_call.1} parent=11 // pred_fallthru
          _
        // Predicated region
        $region17: #{tpu_custom_call.1} parent=11 // pred_check
          %p236 = pneg %p176
        $region18: #{tpu_custom_call.1} parent=11 // pred_check_branch
          %238 = sbr.rel (%p236) target = $region20
        $region19: #{tpu_custom_call.1} parent=11 // pred_region
          %p239 = scmp.lt.s32.totalorder %s31, 0
          %s240 = scalar_select %p239, %s31, 0
          %s241 = scalar_lea.vmem %s4, %s240
        $region20: #{tpu_custom_call.1} parent=11 // pred_fallthru
          _
      $region12: #{tpu_custom_call.1} parent=5 // pred_fallthru
        _
      %p242 = scmp.lt.s32.totalorder %s21, 2
      // Predicated region
      $region21: #{tpu_custom_call.1} parent=5 // pred_check
        %p243 = pneg %p242
      $region22: #{tpu_custom_call.1} parent=5 // pred_check_branch
        %245 = sbr.rel (%p243) target = $region24
      $region23: #{tpu_custom_call.1} parent=5 // pred_region
        // Predicated region
        $region25: #{tpu_custom_call.1} parent=23 // pred_check
          %p246 = pneg %p62
        $region26: #{tpu_custom_call.1} parent=23 // pred_check_branch
          %248 = sbr.rel (%p246) target = $region28
        $region27: #{tpu_custom_call.1} parent=23 // pred_region
          %s249 = sand.u32 %s52, 1
          %s250 = scalar_lea.sflag [#allocation3], %s249
          %s251 = sand.u32 %s52, 1
          %s252 = smul.addr %s251, 8
          %s253 = scalar_lea.vmem [#allocation2], %s252
          %s255 = ssub.s32 128, 128
          %256 = vsyncadd %s250, %s255
          %s257 = sadd.s32 %s30, %s29
          %s258 = smul.addr %s257, 128
          %s259 = scalar_lea.hbm %s0, %s258
          %s261 = sshll.u32 %s253, 4
          %s262 = int_to_ptr.vmem [resolvable:$true] %s261
          %264 = dma.hbm_to_vmem [thread:$0]  %s259, 128, %s262, %s250
        $region28: #{tpu_custom_call.1} parent=23 // pred_fallthru
          _
        // Predicated region
        $region29: #{tpu_custom_call.1} parent=23 // pred_check
          %p265 = pneg %p90
        $region30: #{tpu_custom_call.1} parent=23 // pred_check_branch
          %267 = sbr.rel (%p265) target = $region32
        $region31: #{tpu_custom_call.1} parent=23 // pred_region
          %s268 = sand.u32 %s21, 1
          %s269 = scalar_lea.sflag [#allocation6], %s268
          %s270 = sand.u32 %s80, 1
          %s271 = smul.addr %s270, 8
          %s272 = scalar_lea.vmem [#allocation5], %s271
          %s274 = ssub.s32 128, 128
          %275 = vsyncadd %s269, %s274
          %s276 = sadd.s32 %s30, %s29
          %s277 = smul.addr %s276, 128
          %s278 = scalar_lea.hbm %s1, %s277
          %s280 = sshll.u32 %s272, 4
          %s281 = int_to_ptr.vmem [resolvable:$true] %s280
          %283 = dma.hbm_to_vmem [thread:$0]  %s278, 128, %s281, %s269
        $region32: #{tpu_custom_call.1} parent=23 // pred_fallthru
          _
        // Predicated region
        $region33: #{tpu_custom_call.1} parent=23 // pred_check
          %p284 = pneg %p118
        $region34: #{tpu_custom_call.1} parent=23 // pred_check_branch
          %286 = sbr.rel (%p284) target = $region36
        $region35: #{tpu_custom_call.1} parent=23 // pred_region
          %s287 = sand.u32 %s21, 1
          %s288 = scalar_lea.sflag [#allocation6], %s287
          %s289 = sand.u32 %s108, 1
          %s290 = smul.addr %s289, 8
          %s291 = scalar_lea.vmem [#allocation7], %s290
          %s293 = ssub.s32 128, 128
          %294 = vsyncadd %s288, %s293
          %s295 = sadd.s32 %s30, %s29
          %s296 = smul.addr %s295, 128
          %s297 = scalar_lea.hbm %s2, %s296
          %s299 = sshll.u32 %s291, 4
          %s300 = int_to_ptr.vmem [resolvable:$true] %s299
          %302 = dma.hbm_to_vmem [thread:$0]  %s297, 128, %s300, %s288
        $region36: #{tpu_custom_call.1} parent=23 // pred_fallthru
          _
      $region24: #{tpu_custom_call.1} parent=5 // pred_fallthru
        _
      %p303 = scmp.le.s32.totalorder 1, %s21
      %p304 = scmp.lt.s32.totalorder %s21, 3
      %p305 = pnand %p303, %p304
      %p306 = pneg %p305
      // Predicated region
      $region37: #{tpu_custom_call.1} parent=5 // pred_check
        _
      $region38: #{tpu_custom_call.1} parent=5 // pred_check_branch
        %308 = sbr.rel (%p305) target = $region40
      $region39: #{tpu_custom_call.1} parent=5 // pred_region
        %s309 = ssub.s32 %s21, 1
        %s310 = sand.u32 %s55, 1
        %s311 = scalar_lea.sflag [#allocation3], %s310
        %s312 = sand.u32 %s55, 1
        %s313 = smul.addr %s312, 8
        %s314 = scalar_lea.vmem [#allocation2], %s313
        // Predicated region
        $region41: #{tpu_custom_call.1} parent=39 // pred_check
          %p315 = pneg %p68
        $region42: #{tpu_custom_call.1} parent=39 // pred_check_branch
          %317 = sbr.rel (%p315) target = $region44
        $region43: #{tpu_custom_call.1} parent=39 // pred_region
          %318 = dma.done %s311, 128
        $region44: #{tpu_custom_call.1} parent=39 // pred_fallthru
          _
        %s319 = sand.u32 %s26, 1
        %s320 = scalar_lea.sflag [#allocation6], %s319
        %s321 = sand.u32 %s83, 1
        %s322 = smul.addr %s321, 8
        %s323 = scalar_lea.vmem [#allocation5], %s322
        // Predicated region
        $region45: #{tpu_custom_call.1} parent=39 // pred_check
          %p324 = pneg %p96
        $region46: #{tpu_custom_call.1} parent=39 // pred_check_branch
          %326 = sbr.rel (%p324) target = $region48
        $region47: #{tpu_custom_call.1} parent=39 // pred_region
          %327 = dma.done %s320, 128
        $region48: #{tpu_custom_call.1} parent=39 // pred_fallthru
          _
        %s328 = sand.u32 %s26, 1
        %s329 = scalar_lea.sflag [#allocation6], %s328
        %s330 = sand.u32 %s111, 1
        %s331 = smul.addr %s330, 8
        %s332 = scalar_lea.vmem [#allocation7], %s331
        // Predicated region
        $region49: #{tpu_custom_call.1} parent=39 // pred_check
          %p333 = pneg %p124
        $region50: #{tpu_custom_call.1} parent=39 // pred_check_branch
          %335 = sbr.rel (%p333) target = $region52
        $region51: #{tpu_custom_call.1} parent=39 // pred_region
          %336 = dma.done %s329, 128
        $region52: #{tpu_custom_call.1} parent=39 // pred_fallthru
          _
        // Predicated region
        $region53: #{tpu_custom_call.1} parent=39 // pred_check
          %p337 = pneg %p150
        $region54: #{tpu_custom_call.1} parent=39 // pred_check_branch
          %339 = sbr.rel (%p337) target = $region56
        $region55: #{tpu_custom_call.1} parent=39 // pred_region
          %340 = dma.done [#allocation9], 1536
        $region56: #{tpu_custom_call.1} parent=39 // pred_fallthru
          _
        %s341 = sand.u32 %s55, 1
        %s342 = scalar_lea.sflag [#allocation3], %s341
        %s343 = sand.u32 %s55, 1
        %s344 = smul.addr %s343, 8
        %s345 = scalar_lea.vmem [#allocation2], %s344
        %p346 = pneg %p68
        %p347 = pneg %p65
        %s348 = sand.u32 %s26, 1
        %s349 = scalar_lea.sflag [#allocation6], %s348
        %s350 = sand.u32 %s83, 1
        %s351 = smul.addr %s350, 8
        %s352 = scalar_lea.vmem [#allocation5], %s351
        %p353 = pneg %p96
        %p354 = pneg %p93
        %s355 = sand.u32 %s26, 1
        %s356 = scalar_lea.sflag [#allocation6], %s355
        %s357 = sand.u32 %s111, 1
        %s358 = smul.addr %s357, 8
        %s359 = scalar_lea.vmem [#allocation7], %s358
        %p360 = pneg %p124
        %p361 = pneg %p121
        %p362 = pneg %p150
        %p363 = pneg %p147
        %p364 = scmp.lt.s32.totalorder %s31, 0
        %s365 = scalar_select %p364, %s31, 0
        %s366 = scalar_lea.vmem %s4, %s365
        %p367 = pneg %p176
        %p368 = pneg %p173
        %p369 = pneg %p206
        %p370 = pneg %p203
        %s371 = sand.u32 %s193, 1
        %s372 = scalar_lea.sflag [#allocation4], %s371
        %s373 = sand.u32 %s193, 1
        %s374 = smul.addr %s373, 96
        %s375 = scalar_lea.vmem [#allocation10], %s374
        %p376 = scmp.lt.s32.totalorder %s31, 0
        %s377 = scalar_select %p376, %s31, 0
        %s378 = scalar_lea.vmem %s4, %s377
        %s379 = smul.u32 4, %s31
        %v380 = vld [vmem:[%s314] sm:$0xff]
        %v381 = vld [vmem:[#allocation8] sm:$0xff]
        %v382 = vld [vmem:[#allocation8 + $0x8] sm:$0xff]
        %v383 = vld [vmem:[#allocation8 + $0x10] sm:$0xff]
        %v384 = vld [vmem:[#allocation8 + $0x18] sm:$0xff]
        %v385 = vld [vmem:[%s378] sm:$0x1]
        %v387 = vlaneseq
        %v388 = vshrl.u32 %v387, 7
        %v389 = vsub.s32 0, %v388
        %v390 = vrot.slane %v385, %v389
        %vm392 = vcmask 261120
        %v394 = vsel %vm392, %v380, 0
        %396 = vmatprep.subr.mxu0 0.0
        %397 = vmatpush1.msra.mxu0 0.0
        %398 = vmatprep.subr.mxu0 0.0
        %399 = vmatpush1.msra.mxu0 0.0
        %400 = vmatprep.subr.mxu0 0.0
        %401 = vmatpush1.msra.mxu0 0.0
        %402 = vmatprep.subr.mxu0 0.0
        %403 = vmatpush1.msra.mxu0 0.0
        %404 = vmatprep.subr.mxu0 0.0
        %405 = vmatpush1.msra.mxu0 0.0
        %406 = vmatprep.subr.mxu0 0.0
        %407 = vmatpush1.msra.mxu0 0.0
        %408 = vmatprep.subr.mxu0 0.0
        %409 = vmatpush1.msra.mxu0 0.0
        %410 = vmatprep.subr.mxu0 0.0
        %411 = vmatpush1.msra.mxu0 0.0
        %412 = vmatprep.subr.mxu0 0.0
        %413 = vmatpush1.msra.mxu0 0.0
        %414 = vmatprep.subr.mxu0 0.0
        %415 = vmatpush1.msra.mxu0 0.0
        %416 = vmatprep.subr.mxu0 0.0
        %417 = vmatpush1.msra.mxu0 0.0
        %418 = vmatprep.subr.mxu0 0.0
        %419 = vmatpush1.msra.mxu0 0.0
        %420 = vmatprep.subr.mxu0 0.0
        %421 = vmatpush1.msra.mxu0 %v384
        %422 = vmatprep.subr.mxu0 0.0
        %423 = vmatpush1.msra.mxu0 %v383
        %424 = vmatprep.subr.mxu0 0.0
        %425 = vmatpush1.msra.mxu0 %v382
        %426 = vmatprep.subr.mxu0 0.0
        %427 = vmatpush1.msra.mxu0 %v381
        %428 = vmatprep.subr.mxu0 0.0
        %429 = vmatpush2.msra.mxu0 0.0
        %430 = vmatprep.subr.mxu0 0.0
        %431 = vmatpush2.msra.mxu0 0.0
        %432 = vmatprep.subr.mxu0 0.0
        %433 = vmatpush2.msra.mxu0 0.0
        %434 = vmatprep.subr.mxu0 0.0
        %435 = vmatpush2.msra.mxu0 0.0
        %436 = vmatprep.subr.mxu0 0.0
        %437 = vmatpush2.msra.mxu0 0.0
        %438 = vmatprep.subr.mxu0 0.0
        %439 = vmatpush2.msra.mxu0 0.0
        %440 = vmatprep.subr.mxu0 0.0
        %441 = vmatpush2.msra.mxu0 0.0
        %442 = vmatprep.subr.mxu0 0.0
        %443 = vmatpush2.msra.mxu0 0.0
        %444 = vmatprep.subr.mxu0 0.0
        %445 = vmatpush2.msra.mxu0 0.0
        %446 = vmatprep.subr.mxu0 0.0
        %447 = vmatpush2.msra.mxu0 0.0
        %448 = vmatprep.subr.mxu0 0.0
        %449 = vmatpush2.msra.mxu0 0.0
        %450 = vmatprep.subr.mxu0 0.0
        %451 = vmatpush2.msra.mxu0 0.0
        %452 = vmatprep.subr.mxu0 0.0
        %453 = vmatpush2.msra.mxu0 0.0
        %454 = vmatprep.subr.mxu0 0.0
        %455 = vmatpush2.msra.mxu0 0.0
        %456 = vmatprep.subr.mxu0 0.0
        %457 = vmatpush2.msra.mxu0 0.0
        %458 = vmatprep.subr.mxu0 0.0
        %459 = vmatpush2.msra.mxu0 0.0
        %460 = vmatprep.mubr.f32.mxu0 0.0
        %461 = vmatmul.mubr.f32.gmra.mxu0 %v394
        %v462 = vpop.f32.mrf.mxu0
        %v463 = vadd.f32 %v390, %v462
        %v464 = vpop.f32.mrf.mxu0
        %465 = vdwg.mxu0
        %vm466 = vcmask 64512
        %467 = vst.msk [vmem:[%s375] sm:$0xff] %vm466, %v463
        %469 = vrot.lane.b32.xlu0 %v463, 120
        %v470 = vpop.permute.xlu0 %469
        %s472 = scalar_lea.vmem %s375, 8 [#allocation10]
        %473 = vst.msk [vmem:[%s472] sm:$0xff] %vm466, %v470
        %474 = vrot.lane.b32.xlu0 %v463, 112
        %v475 = vpop.permute.xlu0 %474
        %s477 = scalar_lea.vmem %s375, 16 [#allocation10]
        %478 = vst.msk [vmem:[%s477] sm:$0xff] %vm466, %v475
        %479 = vrot.lane.b32.xlu0 %v463, 104
        %v480 = vpop.permute.xlu0 %479
        %s482 = scalar_lea.vmem %s375, 24 [#allocation10]
        %483 = vst.msk [vmem:[%s482] sm:$0xff] %vm466, %v480
        %v484 = vld [vmem:[%s323] sm:$0xff]
        %s485 = scalar_lea.vmem [#allocation8], 32
        %v486 = vld [vmem:[%s485] sm:$0xff]
        %v487 = vld [vmem:[%s485 + $0x8] sm:$0xff]
        %v488 = vld [vmem:[%s485 + $0x10] sm:$0xff]
        %v489 = vld [vmem:[%s485 + $0x18] sm:$0xff]
        %s490 = scalar_lea.vmem %s378, 1
        %v491 = vld [vmem:[%s490] sm:$0x1]
        %v493 = vlaneseq
        %v494 = vshrl.u32 %v493, 7
        %v495 = vsub.s32 0, %v494
        %v496 = vrot.slane %v491, %v495
        %v499 = vsel %vm392, %v484, 0
        %501 = vmatprep.subr.mxu0 0.0
        %502 = vmatpush1.msra.mxu0 0.0
        %503 = vmatprep.subr.mxu0 0.0
        %504 = vmatpush1.msra.mxu0 0.0
        %505 = vmatprep.subr.mxu0 0.0
        %506 = vmatpush1.msra.mxu0 0.0
        %507 = vmatprep.subr.mxu0 0.0
        %508 = vmatpush1.msra.mxu0 0.0
        %509 = vmatprep.subr.mxu0 0.0
        %510 = vmatpush1.msra.mxu0 0.0
        %511 = vmatprep.subr.mxu0 0.0
        %512 = vmatpush1.msra.mxu0 0.0
        %513 = vmatprep.subr.mxu0 0.0
        %514 = vmatpush1.msra.mxu0 0.0
        %515 = vmatprep.subr.mxu0 0.0
        %516 = vmatpush1.msra.mxu0 0.0
        %517 = vmatprep.subr.mxu0 0.0
        %518 = vmatpush1.msra.mxu0 0.0
        %519 = vmatprep.subr.mxu0 0.0
        %520 = vmatpush1.msra.mxu0 0.0
        %521 = vmatprep.subr.mxu0 0.0
        %522 = vmatpush1.msra.mxu0 0.0
        %523 = vmatprep.subr.mxu0 0.0
        %524 = vmatpush1.msra.mxu0 0.0
        %525 = vmatprep.subr.mxu0 0.0
        %526 = vmatpush1.msra.mxu0 %v489
        %527 = vmatprep.subr.mxu0 0.0
        %528 = vmatpush1.msra.mxu0 %v488
        %529 = vmatprep.subr.mxu0 0.0
        %530 = vmatpush1.msra.mxu0 %v487
        %531 = vmatprep.subr.mxu0 0.0
        %532 = vmatpush1.msra.mxu0 %v486
        %533 = vmatprep.subr.mxu0 0.0
        %534 = vmatpush2.msra.mxu0 0.0
        %535 = vmatprep.subr.mxu0 0.0
        %536 = vmatpush2.msra.mxu0 0.0
        %537 = vmatprep.subr.mxu0 0.0
        %538 = vmatpush2.msra.mxu0 0.0
        %539 = vmatprep.subr.mxu0 0.0
        %540 = vmatpush2.msra.mxu0 0.0
        %541 = vmatprep.subr.mxu0 0.0
        %542 = vmatpush2.msra.mxu0 0.0
        %543 = vmatprep.subr.mxu0 0.0
        %544 = vmatpush2.msra.mxu0 0.0
        %545 = vmatprep.subr.mxu0 0.0
        %546 = vmatpush2.msra.mxu0 0.0
        %547 = vmatprep.subr.mxu0 0.0
        %548 = vmatpush2.msra.mxu0 0.0
        %549 = vmatprep.subr.mxu0 0.0
        %550 = vmatpush2.msra.mxu0 0.0
        %551 = vmatprep.subr.mxu0 0.0
        %552 = vmatpush2.msra.mxu0 0.0
        %553 = vmatprep.subr.mxu0 0.0
        %554 = vmatpush2.msra.mxu0 0.0
        %555 = vmatprep.subr.mxu0 0.0
        %556 = vmatpush2.msra.mxu0 0.0
        %557 = vmatprep.subr.mxu0 0.0
        %558 = vmatpush2.msra.mxu0 0.0
        %559 = vmatprep.subr.mxu0 0.0
        %560 = vmatpush2.msra.mxu0 0.0
        %561 = vmatprep.subr.mxu0 0.0
        %562 = vmatpush2.msra.mxu0 0.0
        %563 = vmatprep.subr.mxu0 0.0
        %564 = vmatpush2.msra.mxu0 0.0
        %565 = vmatprep.mubr.f32.mxu0 0.0
        %566 = vmatmul.mubr.f32.gmra.mxu0 %v499
        %v567 = vpop.f32.mrf.mxu0
        %v568 = vadd.f32 %v496, %v567
        %v569 = vpop.f32.mrf.mxu0
        %570 = vdwg.mxu0
        %s571 = scalar_lea.vmem %s375, 32 [#allocation10]
        %572 = vst.msk [vmem:[%s571] sm:$0xff] %vm466, %v568
        %574 = vrot.lane.b32.xlu0 %v568, 120
        %v575 = vpop.permute.xlu0 %574
        %s577 = scalar_lea.vmem %s375, 40 [#allocation10]
        %578 = vst.msk [vmem:[%s577] sm:$0xff] %vm466, %v575
        %579 = vrot.lane.b32.xlu0 %v568, 112
        %v580 = vpop.permute.xlu0 %579
        %s582 = scalar_lea.vmem %s375, 48 [#allocation10]
        %583 = vst.msk [vmem:[%s582] sm:$0xff] %vm466, %v580
        %584 = vrot.lane.b32.xlu0 %v568, 104
        %v585 = vpop.permute.xlu0 %584
        %s587 = scalar_lea.vmem %s375, 56 [#allocation10]
        %588 = vst.msk [vmem:[%s587] sm:$0xff] %vm466, %v585
        %v589 = vld [vmem:[%s332] sm:$0xff]
        %s590 = scalar_lea.vmem [#allocation8], 64
        %v591 = vld [vmem:[%s590] sm:$0xff]
        %v592 = vld [vmem:[%s590 + $0x8] sm:$0xff]
        %v593 = vld [vmem:[%s590 + $0x10] sm:$0xff]
        %v594 = vld [vmem:[%s590 + $0x18] sm:$0xff]
        %s595 = scalar_lea.vmem %s378, 2
        %v596 = vld [vmem:[%s595] sm:$0x1]
        %v598 = vlaneseq
        %v599 = vshrl.u32 %v598, 7
        %v600 = vsub.s32 0, %v599
        %v601 = vrot.slane %v596, %v600
        %v604 = vsel %vm392, %v589, 0
        %606 = vmatprep.subr.mxu0 0.0
        %607 = vmatpush1.msra.mxu0 0.0
        %608 = vmatprep.subr.mxu0 0.0
        %609 = vmatpush1.msra.mxu0 0.0
        %610 = vmatprep.subr.mxu0 0.0
        %611 = vmatpush1.msra.mxu0 0.0
        %612 = vmatprep.subr.mxu0 0.0
        %613 = vmatpush1.msra.mxu0 0.0
        %614 = vmatprep.subr.mxu0 0.0
        %615 = vmatpush1.msra.mxu0 0.0
        %616 = vmatprep.subr.mxu0 0.0
        %617 = vmatpush1.msra.mxu0 0.0
        %618 = vmatprep.subr.mxu0 0.0
        %619 = vmatpush1.msra.mxu0 0.0
        %620 = vmatprep.subr.mxu0 0.0
        %621 = vmatpush1.msra.mxu0 0.0
        %622 = vmatprep.subr.mxu0 0.0
        %623 = vmatpush1.msra.mxu0 0.0
        %624 = vmatprep.subr.mxu0 0.0
        %625 = vmatpush1.msra.mxu0 0.0
        %626 = vmatprep.subr.mxu0 0.0
        %627 = vmatpush1.msra.mxu0 0.0
        %628 = vmatprep.subr.mxu0 0.0
        %629 = vmatpush1.msra.mxu0 0.0
        %630 = vmatprep.subr.mxu0 0.0
        %631 = vmatpush1.msra.mxu0 %v594
        %632 = vmatprep.subr.mxu0 0.0
        %633 = vmatpush1.msra.mxu0 %v593
        %634 = vmatprep.subr.mxu0 0.0
        %635 = vmatpush1.msra.mxu0 %v592
        %636 = vmatprep.subr.mxu0 0.0
        %637 = vmatpush1.msra.mxu0 %v591
        %638 = vmatprep.subr.mxu0 0.0
        %639 = vmatpush2.msra.mxu0 0.0
        %640 = vmatprep.subr.mxu0 0.0
        %641 = vmatpush2.msra.mxu0 0.0
        %642 = vmatprep.subr.mxu0 0.0
        %643 = vmatpush2.msra.mxu0 0.0
        %644 = vmatprep.subr.mxu0 0.0
        %645 = vmatpush2.msra.mxu0 0.0
        %646 = vmatprep.subr.mxu0 0.0
        %647 = vmatpush2.msra.mxu0 0.0
        %648 = vmatprep.subr.mxu0 0.0
        %649 = vmatpush2.msra.mxu0 0.0
        %650 = vmatprep.subr.mxu0 0.0
        %651 = vmatpush2.msra.mxu0 0.0
        %652 = vmatprep.subr.mxu0 0.0
        %653 = vmatpush2.msra.mxu0 0.0
        %654 = vmatprep.subr.mxu0 0.0
        %655 = vmatpush2.msra.mxu0 0.0
        %656 = vmatprep.subr.mxu0 0.0
        %657 = vmatpush2.msra.mxu0 0.0
        %658 = vmatprep.subr.mxu0 0.0
        %659 = vmatpush2.msra.mxu0 0.0
        %660 = vmatprep.subr.mxu0 0.0
        %661 = vmatpush2.msra.mxu0 0.0
        %662 = vmatprep.subr.mxu0 0.0
        %663 = vmatpush2.msra.mxu0 0.0
        %664 = vmatprep.subr.mxu0 0.0
        %665 = vmatpush2.msra.mxu0 0.0
        %666 = vmatprep.subr.mxu0 0.0
        %667 = vmatpush2.msra.mxu0 0.0
        %668 = vmatprep.subr.mxu0 0.0
        %669 = vmatpush2.msra.mxu0 0.0
        %670 = vmatprep.mubr.f32.mxu0 0.0
        %671 = vmatmul.mubr.f32.gmra.mxu0 %v604
        %v672 = vpop.f32.mrf.mxu0
        %v673 = vadd.f32 %v601, %v672
        %v674 = vpop.f32.mrf.mxu0
        %675 = vdwg.mxu0
        %s676 = scalar_lea.vmem %s375, 64 [#allocation10]
        %677 = vst.msk [vmem:[%s676] sm:$0xff] %vm466, %v673
        %679 = vrot.lane.b32.xlu0 %v673, 120
        %v680 = vpop.permute.xlu0 %679
        %s682 = scalar_lea.vmem %s375, 72 [#allocation10]
        %683 = vst.msk [vmem:[%s682] sm:$0xff] %vm466, %v680
        %684 = vrot.lane.b32.xlu0 %v673, 112
        %v685 = vpop.permute.xlu0 %684
        %s687 = scalar_lea.vmem %s375, 80 [#allocation10]
        %688 = vst.msk [vmem:[%s687] sm:$0xff] %vm466, %v685
        %689 = vrot.lane.b32.xlu0 %v673, 104
        %v690 = vpop.permute.xlu0 %689
        %s692 = scalar_lea.vmem %s375, 88 [#allocation10]
        %693 = vst.msk [vmem:[%s692] sm:$0xff] %vm466, %v690
        %s694 = sand.u32 %s193, 1
        %s695 = scalar_lea.sflag [#allocation4], %s694
        %s696 = sand.u32 %s193, 1
        %s697 = smul.addr %s696, 96
        %s698 = scalar_lea.vmem [#allocation10], %s697
        // Predicated region
        $region57: #{tpu_custom_call.1} parent=39 // pred_check
          %p699 = pneg %p203
        $region58: #{tpu_custom_call.1} parent=39 // pred_check_branch
          %701 = sbr.rel (%p699) target = $region60
        $region59: #{tpu_custom_call.1} parent=39 // pred_region
          #allocation12 [shape = 'u32[6]{0}', space=smem, size = 0x18, scoped, tag = 'DMA stride descriptor']
          %s702 = smul.u32 4, %s31
          %s704 = ssub.s32 1536, 1536
          %705 = vsyncadd %s695, %s704
          %s706 = sadd.s32 %s33, %s702
          %s707 = smul.addr %s32, 4
          %s708 = sadd.s32 %s706, %s707
          %s709 = smul.addr %s708, 128
          %s710 = scalar_lea.hbm %s5, %s709
          %s712 = sshll.u32 1, 14
          %s713 = sxor.u32 4294967295, %s712
          %s716 = sshll.u32 7, 18
          %s717 = sxor.u32 4294967295, %s716
          %s718 = sand.u32 0, %s717
          %s720 = sor.u32 %s718, 0
          %s721 = sshll.u32 %s698, 4
          %s722 = int_to_ptr.vmem [resolvable:$true] %s721
          %728 = sst [smem:[#allocation12]] 512
          %s729 = scalar_lea.smem [#allocation12], 1
          %730 = sst [smem:[%s729]] 1024
          %s731 = scalar_lea.smem [#allocation12], 2
          %732 = sst [smem:[%s731]] 4
          %s733 = scalar_lea.smem [#allocation12], 3
          %734 = sst [smem:[%s733]] 128
          %s735 = scalar_lea.smem [#allocation12], 4
          %736 = sst [smem:[%s735]] 128
          %s737 = scalar_lea.smem [#allocation12], 5
          %738 = sst [smem:[%s737]] 8
          %740 = dma.general %s722, 1536, %s710, %s695, 131072, [#allocation12], %s720, 0
        $region60: #{tpu_custom_call.1} parent=39 // pred_fallthru
          _
      $region40: #{tpu_custom_call.1} parent=5 // pred_fallthru
        _
      %p741 = scmp.le.s32.totalorder 2, %s21
      // Predicated region
      $region61: #{tpu_custom_call.1} parent=5 // pred_check
        %p742 = pneg %p741
      $region62: #{tpu_custom_call.1} parent=5 // pred_check_branch
        %744 = sbr.rel (%p742) target = $region64
      $region63: #{tpu_custom_call.1} parent=5 // pred_region
        %s745 = ssub.s32 %s21, 2
        // Predicated region
        $region65: #{tpu_custom_call.1} parent=63 // pred_check
          %p746 = pneg %p209
        $region66: #{tpu_custom_call.1} parent=63 // pred_check_branch
          %748 = sbr.rel (%p746) target = $region68
        $region67: #{tpu_custom_call.1} parent=63 // pred_region
          %s749 = sand.u32 %s194, 1
          %s750 = scalar_lea.sflag [#allocation4], %s749
          %s751 = sand.u32 %s194, 1
          %s752 = smul.addr %s751, 96
          %s753 = scalar_lea.vmem [#allocation10], %s752
          %754 = dma.done %s750, 1536
        $region68: #{tpu_custom_call.1} parent=63 // pred_fallthru
          _
      $region64: #{tpu_custom_call.1} parent=5 // pred_fallthru
        _
    $region6: #{tpu_custom_call.1} parent=1 // loop_footer
      %s25 = sadd.s32 1, %s21
    $region7: #{tpu_custom_call.1} parent=1 // loop_footer_branch
      %20 = sbr.rel target = $region3
    $region8: #{tpu_custom_call.1} parent=1 // loop_exit
      _
    %755 = vsyncpa [#allocation3], 1
    %s756 = scalar_lea.sflag [#allocation3], 1
    %757 = vsyncpa %s756, 1
    %758 = vsyncpa [#allocation6], 1
    %s759 = scalar_lea.sflag [#allocation6], 1
    %760 = vsyncpa %s759, 1
    %761 = vsyncpa [#allocation9], 1
    %762 = vsyncpa [#allocation4], 1
    %s763 = scalar_lea.sflag [#allocation4], 1
    %764 = vsyncpa %s763, 1

</llo_original>
